<compile_context>
chip_gen: v6e
topology: v6e:2x2x1
jax: 0.10.0
libtpu: 0.0.40
codegen_flags: <defaults>
</compile_context>

<pallas_src>
import functools

import jax
import jax.numpy as jnp
from jax.experimental import pallas as pl
from jax.experimental.pallas import tpu as pltpu


def _round_up(x, m):
    return ((x + m - 1) // m) * m


def _dec_init_kernel(x_ref, w_ref, b_ref, o_ref):
    # x_ref: (tm, d_in)  input dtype (f32); cast to the weight dtype in-kernel
    #        (rides in free VPU slots under the MXU -- no extra HBM pass).
    # w_ref: (d_in, tn)  compute dtype (bf16), resident or streamed per N-tile.
    # b_ref: (1, tn)     float32.
    # o_ref: (tm, tn)    out dtype.
    x = x_ref[...].astype(w_ref.dtype)
    acc = jnp.dot(x, w_ref[...], preferred_element_type=jnp.float32)
    z = acc + b_ref[...]
    if o_ref.dtype == jnp.bfloat16:
        # bf16 EUP path (v6e/v7x): halves tanh pushes and store volume.
        o_ref[...] = jnp.tanh(z.astype(jnp.bfloat16))
    else:
        # f32 epilogue (required on v5e: no bf16 VPU/EUP there).
        o_ref[...] = jnp.tanh(z).astype(o_ref.dtype)


def prepare_dec_init_params(weight, bias, *, compute_dtype=jnp.bfloat16):
    """One-time parameter prep (do at load time, NOT every forward call).

    weight: (D_out, D_in) float32, PyTorch nn.Linear layout.
    bias:   (D_out,) float32.

    Returns:
      w_prepped: (D_in, N_pad) compute_dtype, N_pad = round_up(D_out, 128).
                 Pre-transposed + zero-padded on N (lane-dense output).
      b_prepped: (1, N_pad) float32, zero-padded.
      d_out:     true output width (Python int).
    """
    d_out, d_in = weight.shape
    n_pad = _round_up(d_out, 128)
    w_t = jnp.transpose(weight)                        # (D_in, D_out), once
    w_t = jnp.pad(w_t, ((0, 0), (0, n_pad - d_out)))   # zero cols: exact math
    b = jnp.pad(bias.astype(jnp.float32), (0, n_pad - d_out)).reshape(1, n_pad)
    return w_t.astype(compute_dtype), b, int(d_out)


@functools.partial(
    jax.jit, static_argnames=("d_out", "block_m", "block_n", "out_dtype"))
def dec_init_forward(last_enc_h, w_prepped, b_prepped, *, d_out,
                     block_m=512, block_n=512, out_dtype=None):
    """tanh(last_enc_h @ W^T + b), matching nn.Linear + nn.Tanh.

    last_enc_h: (B, D_in) float32 (passed to the kernel unpadded, uncast).
    w_prepped, b_prepped: outputs of prepare_dec_init_params.
    out_dtype: e.g. jnp.bfloat16 to halve output writeback traffic; default
               keeps the input dtype (f32, module semantics).
    """
    B, d_in = last_enc_h.shape
    k_w, n_pad = w_prepped.shape
    assert k_w == d_in and d_out <= n_pad

    out_dtype = (jnp.dtype(out_dtype) if out_dtype is not None
                 else last_enc_h.dtype)

    # Batch tile: sublane-aligned (16 rows when the stored output packs
    # 2 elements per 32-bit lane word, else 8).  No batch pre-pad: cdiv grid
    # + masked tail store handle ragged B.
    align = 16 if out_dtype.itemsize < 4 else 8
    tm = min(block_m, _round_up(B, align))
    grid_m = pl.cdiv(B, tm)

    # N tile: lane-dense (multiple of 128).  grid_n > 1 streams the weight in
    # chunks (overlapping its DMA with MXU work) and lets the two v7x
    # TensorCores split N when grid_m == 1.
    tn = min(block_n, n_pad)
    grid_n = pl.cdiv(n_pad, tn)

    x_spec = pl.BlockSpec((tm, d_in), lambda i, j: (i, 0))
    if grid_n == 1:
        # Constant index_map -> weight/bias stay VMEM-resident; single-buffer
        # them (double-buffering a constant block is pure VMEM waste).
        w_spec = pl.BlockSpec((d_in, tn), lambda i, j: (0, 0),
                              pipeline_mode=pl.Buffered(1))
        bias_spec = pl.BlockSpec((1, tn), lambda i, j: (0, 0),
                                 pipeline_mode=pl.Buffered(1))
    else:
        w_spec = pl.BlockSpec((d_in, tn), lambda i, j: (0, j))
        bias_spec = pl.BlockSpec((1, tn), lambda i, j: (0, j))
    o_spec = pl.BlockSpec((tm, tn), lambda i, j: (i, j))

    # Explicit scoped-VMEM budget so larger tiles don't trip the 16/32 MiB
    # defaults (v5e/v6e/v7x); capped at v7x's 64 MiB physical per-TC VMEM.
    w_bufs = 1 if grid_n == 1 else 2
    est = (2 * tm * d_in * last_enc_h.dtype.itemsize          # x, double-buffered
           + w_bufs * d_in * tn * w_prepped.dtype.itemsize    # weight
           + w_bufs * tn * b_prepped.dtype.itemsize           # bias
           + 2 * tm * tn * out_dtype.itemsize)                # out, double-buffered
    vmem_limit = int(min(max(2 * est, 32 << 20), 64 << 20))

    out = pl.pallas_call(
        _dec_init_kernel,
        out_shape=jax.ShapeDtypeStruct((B, n_pad), out_dtype),
        grid=(grid_m, grid_n),
        in_specs=[x_spec, w_spec, bias_spec],
        out_specs=o_spec,
        compiler_params=pltpu.CompilerParams(
            dimension_semantics=("parallel", "parallel"),
            vmem_limit_bytes=vmem_limit),
    )(last_enc_h, w_prepped, b_prepped)

    if d_out != n_pad:
        # No-op for typical dec_rnn_size (512/1024/2048); only needed when
        # dec_rnn_size % 128 != 0.
        out = out[:, :d_out]
    return out


if __name__ == "__main__":
    # Small config consistent with the module:
    #   opt.brnn = True  -> num_directions = 2
    #   opt.enc_rnn_size = 32 -> Linear in_features = 16
    #   opt.dec_rnn_size = 32 -> Linear out_features = 32
    batch = 8
    enc_rnn_size = 32
    num_directions = 2
    dec_rnn_size = 32
    d_in = enc_rnn_size // num_directions

    key = jax.random.PRNGKey(0)
    kx, kw, kb, kx2 = jax.random.split(key, 4)

    # Deterministic synthetic parameters (no checkpoint load).
    last_enc_h = jax.random.normal(kx, (batch, d_in), dtype=jnp.float32)
    weight = (jax.random.uniform(kw, (dec_rnn_size, d_in), dtype=jnp.float32)
              - 0.5) * 0.2                      # ~ U(-0.1, 0.1)
    bias = (jax.random.uniform(kb, (dec_rnn_size,), dtype=jnp.float32)
            - 0.5) * 0.2

    # One-time parameter prep (transpose + N-pad + bf16 cast).
    w_p, b_p, d_out = prepare_dec_init_params(weight, bias,
                                              compute_dtype=jnp.bfloat16)

    # Case 1: batch divisible by the sublane tile.
    out = jax.block_until_ready(dec_init_forward(last_enc_h, w_p, b_p,
                                                 d_out=d_out))
    ref = jnp.tanh(last_enc_h @ weight.T + bias)
    assert out.shape == (batch, dec_rnn_size)
    # bf16 MXU inputs (f32 accumulation/epilogue): small quantization error.
    assert jnp.allclose(out, ref, atol=2e-2, rtol=2e-2)

    # Case 2: ragged batch (13 rows, block_m=8 -> cdiv grid with a masked
    # partial tail block): exercises the no-pad / no-batch-slice path.
    x2 = jax.random.normal(kx2, (13, d_in), dtype=jnp.float32)
    out2 = jax.block_until_ready(dec_init_forward(x2, w_p, b_p,
                                                  d_out=d_out, block_m=8))
    ref2 = jnp.tanh(x2 @ weight.T + bias)
    assert out2.shape == (13, dec_rnn_size)
    assert jnp.allclose(out2, ref2, atol=2e-2, rtol=2e-2)

    print("KERNEL_OK")
</pallas_src>

<mosaic_0001>
module attributes {stable_mosaic.version = 11 : i64} {
  func.func @_dec_init_kernel(%arg0: i32, %arg1: i32, %arg2: memref<8x16xf32, #tpu.memory_space<vmem>>, %arg3: memref<16x128xbf16, #tpu.memory_space<vmem>>, %arg4: memref<1x128xf32, #tpu.memory_space<vmem>>, %arg5: memref<8x128xf32, #tpu.memory_space<vmem>>) attributes {dimension_semantics = [#tpu.dimension_semantics<parallel>, #tpu.dimension_semantics<parallel>], iteration_bounds = array<i64: 1, 1>, scalar_prefetch = 0 : i64, scratch_operands = 0 : i64, tpu.core_type = #tpu.core_type<tc>, window_params = [{transform_indices = @transform_0, window_bounds = array<i64: 8, 16>}, {pipeline_mode = #tpu.pipeline_mode<synchronous>, transform_indices = @transform_1, window_bounds = array<i64: 16, 128>}, {pipeline_mode = #tpu.pipeline_mode<synchronous>, transform_indices = @transform_2, window_bounds = array<i64: 1, 128>}, {transform_indices = @transform_3, window_bounds = array<i64: 8, 128>}]} {
    %c0 = arith.constant 0 : index
    %c0_0 = arith.constant 0 : index
    %0 = vector.load %arg2[%c0, %c0_0] : memref<8x16xf32, #tpu.memory_space<vmem>>, vector<8x16xf32>
    %1 = arith.truncf %0 : vector<8x16xf32> to vector<8x16xbf16>
    %c0_1 = arith.constant 0 : index
    %c0_2 = arith.constant 0 : index
    %2 = vector.load %arg3[%c0_1, %c0_2] : memref<16x128xbf16, #tpu.memory_space<vmem>>, vector<16x128xbf16>
    %cst = arith.constant dense<0.000000e+00> : vector<8x128xf32>
    %3 = tpu.matmul %1, %2, %cst {dimension_numbers = #tpu.dot_dimension_numbers<[1], [0], [0], [1], [0, 0, 1, 1], [], []>} : vector<8x16xbf16>, vector<16x128xbf16>, vector<8x128xf32> -> vector<8x128xf32>
    %c0_3 = arith.constant 0 : index
    %c0_4 = arith.constant 0 : index
    %4 = vector.load %arg4[%c0_3, %c0_4] : memref<1x128xf32, #tpu.memory_space<vmem>>, vector<1x128xf32>
    %5 = vector.broadcast %4 : vector<1x128xf32> to vector<8x128xf32>
    %6 = arith.addf %3, %5 : vector<8x128xf32>
    %7 = math.tanh %6 : vector<8x128xf32>
    %c0_5 = arith.constant 0 : index
    %c0_6 = arith.constant 0 : index
    %8 = vector.load %arg5[%c0_5, %c0_6] : memref<8x128xf32, #tpu.memory_space<vmem>>, vector<8x128xf32>
    tpu.vector_store %arg5[%c0_5, %c0_6], %7 {strides = array<i32>} : memref<8x128xf32, #tpu.memory_space<vmem>>, vector<8x128xf32>,
    return
  }
  func.func @transform_0(%arg0: i32, %arg1: i32) -> (i32, i32) {
    %c0_i32 = arith.constant 0 : i32
    %c0_i32_0 = arith.constant 0 : i32
    return %arg0, %c0_i32 : i32, i32
  }
  func.func @transform_1(%arg0: i32, %arg1: i32) -> (i32, i32) {
    %c0_i32 = arith.constant 0 : i32
    %c0_i32_0 = arith.constant 0 : i32
    %c0_i32_1 = arith.constant 0 : i32
    return %c0_i32, %c0_i32_0 : i32, i32
  }
  func.func @transform_2(%arg0: i32, %arg1: i32) -> (i32, i32) {
    %c0_i32 = arith.constant 0 : i32
    %c0_i32_0 = arith.constant 0 : i32
    %c0_i32_1 = arith.constant 0 : i32
    return %c0_i32, %c0_i32_0 : i32, i32
  }
  func.func @transform_3(%arg0: i32, %arg1: i32) -> (i32, i32) {
    %c0_i32 = arith.constant 0 : i32
    return %arg0, %arg1 : i32, i32
  }
}

</mosaic_0001>

<llo_original>
// kernel: dec_init_forward.1
$region0: #{dec_init_forward.1}
  #allocation0 [shape = 'u32[]', space=smem, size = 0x4, offset = 0x4, fixed_abs, tag = 'smem constant byte address 0x4 - core index']
  #allocation1 [shape = 'u32[144,128]{1,0:T(1,128)}', space=vmem, size = 0x12000, scoped, tag = 'internal scratch']
  %s0 = inlined_call_operand.hbm [shape: f32[8,16], index: 0, kind: input, shape index: {}]
  %s1 = inlined_call_operand.hbm [shape: bf16[16,128], index: 1, kind: input, shape index: {}]
  %s2 = inlined_call_operand.vmem [shape: f32[1,128], index: 2, kind: input, shape index: {}]
  %s3 = inlined_call_operand.hbm [shape: f32[8,128], index: 3, kind: output, shape index: {}]
  %s4 = sld [smem:[#allocation0]]
  $region30: #{dec_init_forward.1} parent=0
    _
  %s6 = ssub.s32 1, %s4
  %s7 = scalar_select 0, %s6, %s4
  $region1: #{dec_init_forward.1} parent=0
    #allocation2 [shape = 'u8[4096]{0}', space=vmem, size = 0x1000, scoped, tag = 'input window, operand 0, single buffered']
    #allocation3 [shape = 's32[1]{0}', space=sflag, size = 0x4, scoped, tag = 'scoped memory for dec_init_forward.1']
    #allocation4 [shape = 's32[1]{0}', space=sflag, size = 0x4, scoped, tag = 'scoped memory for dec_init_forward.1']
    #allocation5 [shape = 'u8[4096]{0}', space=vmem, size = 0x1000, scoped, tag = 'input window, operand 1, single buffered']
    #allocation6 [shape = 's32[1]{0}', space=sflag, size = 0x4, scoped, tag = 'scoped memory for dec_init_forward.1']
    #allocation7 [shape = 'u8[4096]{0}', space=vmem, size = 0x1000, scoped, tag = 'output window, operand 0, single buffered']
    %8 = vsyncpa [#allocation3], 0
    %9 = vsyncpa [#allocation6], 0
    %10 = vsyncpa [#allocation4], 0
    // Predicated region
    $region2: #{dec_init_forward.1} parent=1 // pred_check
      _
    $region3: #{dec_init_forward.1} parent=1 // pred_check_branch
      %12 = sbr.rel (0) target = $region5
    $region4: #{dec_init_forward.1} parent=1 // pred_region
      %s14 = ssub.s32 128, 128
      %15 = vsyncadd [#allocation3], %s14
      %s17 = sshll.u32 [#allocation2], 4
      %s18 = int_to_ptr.vmem [resolvable:$true] %s17
      %20 = dma.hbm_to_vmem [thread:$0]  %s0, 128, %s18, [#allocation3]
    $region5: #{dec_init_forward.1} parent=1 // pred_fallthru
      _
    // Predicated region
    $region6: #{dec_init_forward.1} parent=1 // pred_check
      _
    $region7: #{dec_init_forward.1} parent=1 // pred_check_branch
      %22 = sbr.rel (0) target = $region9
    $region8: #{dec_init_forward.1} parent=1 // pred_region
      %s24 = ssub.s32 128, 128
      %25 = vsyncadd [#allocation6], %s24
      %s26 = sshll.u32 [#allocation5], 4
      %s27 = int_to_ptr.vmem [resolvable:$true] %s26
      %32 = dma.hbm_to_vmem [thread:$0]  %s1, 128, %s27, [#allocation6], 64, 64, 4
    $region9: #{dec_init_forward.1} parent=1 // pred_fallthru
      _
    // Predicated region
    $region10: #{dec_init_forward.1} parent=1 // pred_check
      _
    $region11: #{dec_init_forward.1} parent=1 // pred_check_branch
      %34 = sbr.rel (0) target = $region13
    $region12: #{dec_init_forward.1} parent=1 // pred_region
      _
    $region13: #{dec_init_forward.1} parent=1 // pred_fallthru
      _
    // Predicated region
    $region14: #{dec_init_forward.1} parent=1 // pred_check
      _
    $region15: #{dec_init_forward.1} parent=1 // pred_check_branch
      %36 = sbr.rel (0) target = $region17
    $region16: #{dec_init_forward.1} parent=1 // pred_region
      %37 = dma.done [#allocation3], 128
    $region17: #{dec_init_forward.1} parent=1 // pred_fallthru
      _
    // Predicated region
    $region18: #{dec_init_forward.1} parent=1 // pred_check
      _
    $region19: #{dec_init_forward.1} parent=1 // pred_check_branch
      %39 = sbr.rel (0) target = $region21
    $region20: #{dec_init_forward.1} parent=1 // pred_region
      %40 = dma.done [#allocation6], 128
    $region21: #{dec_init_forward.1} parent=1 // pred_fallthru
      _
    %v42 = vld [vmem:[#allocation2] sm:$0xff]
    %v43 = vpack.c.bf16 %v42, %v42
    %v44 = vld [vmem:[#allocation5] sm:$0xf]
    %v45 = vld [vmem:[#allocation5 + $0x4] sm:$0xf]
    %v46 = vld [vmem:[%s2] sm:$0x1]
    %v48 = vlaneseq
    %v49 = vshrl.u32 %v48, 7
    %v50 = vsub.s32 0, %v49
    %v51 = vrot.slane %v46, %v50
    %v55 = vunpack.c.l.b16 %v44
    %v56 = vunpack.c.l.b16 %v45
    %v57 = vpack.c.b16 %v56, %v55
    %vm59 = vcmask 130048
    %v61 = vsel %vm59, %v43, 0
    %63 = vmatprep.subr.bf16.mxu0 0
    %64 = vmatpush1.bf16.msra.mxu0 0
    %65 = vmatprep.subr.bf16.mxu0 0
    %66 = vmatpush1.bf16.msra.mxu0 0
    %67 = vmatprep.subr.bf16.mxu0 0
    %68 = vmatpush1.bf16.msra.mxu0 0
    %69 = vmatprep.subr.bf16.mxu0 0
    %70 = vmatpush1.bf16.msra.mxu0 0
    %71 = vmatprep.subr.bf16.mxu0 0
    %72 = vmatpush1.bf16.msra.mxu0 0
    %73 = vmatprep.subr.bf16.mxu0 0
    %74 = vmatpush1.bf16.msra.mxu0 0
    %75 = vmatprep.subr.bf16.mxu0 0
    %76 = vmatpush1.bf16.msra.mxu0 0
    %77 = vmatprep.subr.bf16.mxu0 0
    %78 = vmatpush1.bf16.msra.mxu0 %v57
    %79 = vmatprep.subr.bf16.mxu0 0
    %80 = vmatpush2.bf16.msra.mxu0 0
    %81 = vmatprep.subr.bf16.mxu0 0
    %82 = vmatpush2.bf16.msra.mxu0 0
    %83 = vmatprep.subr.bf16.mxu0 0
    %84 = vmatpush2.bf16.msra.mxu0 0
    %85 = vmatprep.subr.bf16.mxu0 0
    %86 = vmatpush2.bf16.msra.mxu0 0
    %87 = vmatprep.subr.bf16.mxu0 0
    %88 = vmatpush2.bf16.msra.mxu0 0
    %89 = vmatprep.subr.bf16.mxu0 0
    %90 = vmatpush2.bf16.msra.mxu0 0
    %91 = vmatprep.subr.bf16.mxu0 0
    %92 = vmatpush2.bf16.msra.mxu0 0
    %93 = vmatprep.subr.bf16.mxu0 0
    %94 = vmatpush2.bf16.msra.mxu0 0
    %95 = vmatprep.mubr.bf16.mxu0 0
    %96 = vmatmul.mubr.bf16.gmra.mxu0 %v61
    %v97 = vpop.f32.mrf.mxu0
    %v98 = vadd.f32 %v51, %v97
    %v99 = vpop.f32.mrf.mxu0
    %v100 = vpop.f32.mrf.mxu0
    %v101 = vpop.f32.mrf.mxu0
    %102 = vdwg.mxu0
    %v103 = vtanh.pop %v98
    %104 = vst [vmem:[#allocation7] sm:$0xff] %v103
    // Predicated region
    $region22: #{dec_init_forward.1} parent=1 // pred_check
      _
    $region23: #{dec_init_forward.1} parent=1 // pred_check_branch
      %106 = sbr.rel (0) target = $region25
    $region24: #{dec_init_forward.1} parent=1 // pred_region
      %s108 = ssub.s32 128, 128
      %109 = vsyncadd [#allocation4], %s108
      %s111 = sshll.u32 [#allocation7], 4
      %s112 = int_to_ptr.vmem [resolvable:$true] %s111
      %114 = dma.vmem_to_hbm [thread:$0]  %s112, 128, %s3, [#allocation4]
    $region25: #{dec_init_forward.1} parent=1 // pred_fallthru
      _
    // Predicated region
    $region26: #{dec_init_forward.1} parent=1 // pred_check
      _
    $region27: #{dec_init_forward.1} parent=1 // pred_check_branch
      %116 = sbr.rel (0) target = $region29
    $region28: #{dec_init_forward.1} parent=1 // pred_region
      %117 = dma.done [#allocation4], 128
    $region29: #{dec_init_forward.1} parent=1 // pred_fallthru
      _
    %118 = vsyncpa [#allocation3], 1
    %119 = vsyncpa [#allocation6], 1
    %120 = vsyncpa [#allocation4], 1

</llo_original>
